<compile_context>
chip_gen: v6e
topology: v6e:2x2x1
jax: 0.10.0
libtpu: 0.0.40
codegen_flags: <defaults>
</compile_context>

<pallas_src>
import functools
import math

import jax
import jax.numpy as jnp
from jax.experimental import pallas as pl
from jax.experimental.pallas import tpu as pltpu

_LANE = 128
_SUBLANE = 8
_BF16_SUBLANE = 16      # bf16 packs two rows per sublane
_MAX_BLOCK_B = 2048     # (2048,128) bf16 out tile = 0.5 MiB; tiny vs scoped VMEM


def _round_up(x, m):
    return ((x + m - 1) // m) * m


def _policy_kernel(x_ref, w0_ref, b0_ref, w1_ref, b1_ref, w2_ref, b2_ref, o_ref,
                   *, head_slices):
    # Trunk: two Linear + ReLU layers. bf16 operands on the MXU, f32 accumulate.
    x = x_ref[...].astype(jnp.bfloat16)
    h0 = jnp.dot(x, w0_ref[...], preferred_element_type=jnp.float32) + b0_ref[...]
    h0 = jnp.maximum(h0, 0.0)

    h1 = jnp.dot(h0.astype(jnp.bfloat16), w1_ref[...],
                 preferred_element_type=jnp.float32) + b1_ref[...]
    h1 = jnp.maximum(h1, 0.0)

    # All heads fused into one lane-dense matmul: (block_b, H1p) @ (H1p, a_pad).
    logits = jnp.dot(h1.astype(jnp.bfloat16), w2_ref[...],
                     preferred_element_type=jnp.float32) + b2_ref[...]

    # Segmented softmax with ONE full-width exp / reciprocal / multiply.
    lane = jax.lax.broadcasted_iota(jnp.int32, logits.shape, 1)
    masks = [(lane >= off) & (lane < off + ad) for off, ad in head_slices]

    # Lane-mapped per-head max. Padded lanes keep maxmap=0; their logits are
    # exactly 0 (zero weights & bias), so exp(0-0)=1 stays finite.
    maxmap = jnp.zeros_like(logits)
    for mask in masks:
        m_h = jnp.max(jnp.where(mask, logits, -jnp.inf), axis=-1, keepdims=True)
        maxmap = jnp.where(mask, m_h, maxmap)

    e = jnp.exp(logits - maxmap)          # single full-width EUP pass

    # Lane-mapped per-head denominator; padded lanes guarded with 1 (no Inf/NaN).
    denom = jnp.ones_like(logits)
    for mask in masks:
        s_h = jnp.sum(jnp.where(mask, e, 0.0), axis=-1, keepdims=True)
        denom = jnp.where(mask, s_h, denom)

    o_ref[...] = (e * pl.reciprocal(denom, approx=True)).astype(o_ref.dtype)


def _pick_block_b(batch):
    """Large tile (amortize per-step overhead), even grid of >=2 steps when the
    batch allows (v7x megacore), multiple of 16 for bf16 sublane packing."""
    if batch <= 2 * _BF16_SUBLANE:
        return _round_up(batch, _SUBLANE)                 # tiny batch: one step
    n_pairs = max(1, pl.cdiv(batch, 2 * _MAX_BLOCK_B))    # grid ~ 2*n_pairs steps
    return _round_up(pl.cdiv(batch, 2 * n_pairs), _BF16_SUBLANE)


def mlp_multicategorical_policy(state, params, action_dims, *, block_b=None,
                                out_dtype=jnp.bfloat16, return_packed=False,
                                extra_buffering=None):
    """Forward pass.

    Returns a list of per-head softmax probability arrays, or (packed, slices)
    when return_packed=True (packed is the lane-dense (B, a_pad) tensor; use it
    directly downstream to avoid a second pass over the output in HBM).

    state: (B, state_dim) f32
    params: dict with w0 (D,H0), b0 (1,H0), w1 (H0,H1), b1 (1,H1),
            w2 (H1, sum(action_dims)), b2 (1, sum(action_dims)) -- heads concatenated.
    """
    B, D = state.shape
    H0 = params["w0"].shape[1]
    H1 = params["w1"].shape[1]
    a_total = int(sum(int(a) for a in action_dims))
    a_pad = _round_up(max(a_total, 1), _LANE)

    # Lane-dense hidden dims: zero-pad to multiples of 128. Padded h-lanes are
    # exactly zero (bias 0, ReLU), padded weight rows are zero -> identical math.
    H0p = _round_up(H0, _LANE)
    H1p = _round_up(H1, _LANE)

    w0 = jnp.zeros((D, H0p), jnp.float32).at[:, :H0].set(params["w0"]).astype(jnp.bfloat16)
    b0 = jnp.zeros((1, H0p), jnp.float32).at[:, :H0].set(params["b0"])
    w1 = jnp.zeros((H0p, H1p), jnp.float32).at[:H0, :H1].set(params["w1"]).astype(jnp.bfloat16)
    b1 = jnp.zeros((1, H1p), jnp.float32).at[:, :H1].set(params["b1"])
    w2 = jnp.zeros((H1p, a_pad), jnp.float32).at[:H1, :a_total].set(params["w2"]).astype(jnp.bfloat16)
    b2 = jnp.zeros((1, a_pad), jnp.float32).at[:, :a_total].set(params["b2"])

    if block_b is None:
        block_b = _pick_block_b(B)
    elif block_b != B and block_b % _SUBLANE != 0:
        raise ValueError("block_b must be a multiple of 8 (or equal to the batch size)")
    grid = (pl.cdiv(B, block_b),)

    head_slices = []
    off = 0
    for ad in action_dims:
        head_slices.append((off, int(ad)))
        off += int(ad)
    head_slices = tuple(head_slices)

    kernel = functools.partial(_policy_kernel, head_slices=head_slices)

    # Optional deeper pipelining on the streamed arrays (state + output) if
    # xprof shows exposed DMA between the (tiny) compute steps.
    def _stream_spec(shape, index_map):
        if extra_buffering:
            return pl.BlockSpec(shape, index_map,
                                pipeline_mode=pl.Buffered(int(extra_buffering)))
        return pl.BlockSpec(shape, index_map)

    out = pl.pallas_call(
        kernel,
        out_shape=jax.ShapeDtypeStruct((B, a_pad), out_dtype),
        grid_spec=pl.GridSpec(
            grid=grid,
            in_specs=[
                _stream_spec((block_b, D), lambda i: (i, 0)),   # state tile
                pl.BlockSpec((D, H0p), lambda i: (0, 0)),       # w0 (bf16, lane-padded)
                pl.BlockSpec((1, H0p), lambda i: (0, 0)),       # b0
                pl.BlockSpec((H0p, H1p), lambda i: (0, 0)),     # w1 (bf16, lane-padded)
                pl.BlockSpec((1, H1p), lambda i: (0, 0)),       # b1
                pl.BlockSpec((H1p, a_pad), lambda i: (0, 0)),   # all heads, padded
                pl.BlockSpec((1, a_pad), lambda i: (0, 0)),     # head biases, padded
            ],
            out_specs=_stream_spec((block_b, a_pad), lambda i: (i, 0)),
        ),
        compiler_params=pltpu.CompilerParams(
            dimension_semantics=("parallel",)),
    )(state, w0, b0, w1, b1, w2, b2)

    if return_packed:
        return out, head_slices
    # Legacy list-of-heads API (matches the PyTorch forward). For large B prefer
    # return_packed=True to skip this extra pass over the output.
    return [out[:, o:o + ad] for o, ad in head_slices]


def _xavier_uniform(key, fan_in, fan_out, gain=1.0):
    # Matches torch.nn.init.xavier_uniform_ semantics; stored (in, out) for x @ W.
    limit = gain * math.sqrt(6.0 / (fan_in + fan_out))
    return jax.random.uniform(key, (fan_in, fan_out), jnp.float32, -limit, limit)


def init_params(key, state_dim, action_dims, hidden_sizes=(64, 64)):
    h0, h1 = hidden_sizes
    keys = jax.random.split(key, 2 + len(action_dims))
    w2_cols, b2_cols = [], []
    for k, ad in zip(keys[2:], action_dims):
        w2_cols.append(_xavier_uniform(k, h1, ad))
        b2_cols.append(jnp.zeros((1, ad), jnp.float32))
    return {
        "w0": _xavier_uniform(keys[0], state_dim, h0),
        "b0": jnp.zeros((1, h0), jnp.float32),
        "w1": _xavier_uniform(keys[1], h0, h1),
        "b1": jnp.zeros((1, h1), jnp.float32),
        "w2": jnp.concatenate(w2_cols, axis=1),
        "b2": jnp.concatenate(b2_cols, axis=1),
    }


def _reference(state, p, action_dims):
    h = jnp.maximum(state @ p["w0"] + p["b0"], 0.0)
    h = jnp.maximum(h @ p["w1"] + p["b1"], 0.0)
    outs, off = [], 0
    for ad in action_dims:
        logits = h @ p["w2"][:, off:off + ad] + p["b2"][:, off:off + ad]
        outs.append(jax.nn.softmax(logits, axis=-1))
        off += ad
    return outs


# TODO(synk): dist/log_prob/entropy/sample (torch.distributions.Categorical
# wrappers) are host-side post-processing of these probabilities and are not
# implemented as Pallas kernels; forward() is fully covered.

if __name__ == "__main__":
    key = jax.random.PRNGKey(0)
    k_param, k_state = jax.random.split(key)

    batch, state_dim = 64, 16          # small, but exercises a 2-step grid
    action_dims = (3, 4)
    params = init_params(k_param, state_dim, action_dims, hidden_sizes=(64, 64))
    state = jax.random.normal(k_state, (batch, state_dim), dtype=jnp.float32)

    probs = mlp_multicategorical_policy(state, params, action_dims)
    probs = jax.block_until_ready(probs)

    refs = _reference(state, params, action_dims)
    assert len(probs) == len(action_dims)
    for p_out, p_ref, ad in zip(probs, refs, action_dims):
        assert p_out.shape == (batch, ad), p_out.shape
        p32 = p_out.astype(jnp.float32)
        assert jnp.allclose(jnp.sum(p32, axis=-1), 1.0, atol=1.5e-2), \
            "softmax rows do not sum to 1"
        assert jnp.allclose(p32, p_ref, atol=2.5e-2, rtol=2.5e-2), (
            "mismatch vs reference:", float(jnp.max(jnp.abs(p32 - p_ref))))

    # Packed lane-dense form (skips per-head wrapper slicing entirely).
    packed, slices = mlp_multicategorical_policy(state, params, action_dims,
                                                 return_packed=True)
    packed = jax.block_until_ready(packed)
    assert packed.shape == (batch, 128)
    assert slices == ((0, 3), (3, 4))

    print("KERNEL_OK")
</pallas_src>

<mosaic_0001>
module attributes {stable_mosaic.version = 11 : i64} {
  func.func @_policy_kernel(%arg0: i32, %arg1: memref<32x16xf32, #tpu.memory_space<vmem>>, %arg2: memref<16x128xbf16, #tpu.memory_space<vmem>>, %arg3: memref<1x128xf32, #tpu.memory_space<vmem>>, %arg4: memref<128x128xbf16, #tpu.memory_space<vmem>>, %arg5: memref<1x128xf32, #tpu.memory_space<vmem>>, %arg6: memref<128x128xbf16, #tpu.memory_space<vmem>>, %arg7: memref<1x128xf32, #tpu.memory_space<vmem>>, %arg8: memref<32x128xbf16, #tpu.memory_space<vmem>>) attributes {dimension_semantics = [#tpu.dimension_semantics<parallel>], iteration_bounds = array<i64: 2>, scalar_prefetch = 0 : i64, scratch_operands = 0 : i64, tpu.core_type = #tpu.core_type<tc>, window_params = [{transform_indices = @transform_0, window_bounds = array<i64: 32, 16>}, {pipeline_mode = #tpu.pipeline_mode<synchronous>, transform_indices = @transform_1, window_bounds = array<i64: 16, 128>}, {pipeline_mode = #tpu.pipeline_mode<synchronous>, transform_indices = @transform_2, window_bounds = array<i64: 1, 128>}, {pipeline_mode = #tpu.pipeline_mode<synchronous>, transform_indices = @transform_3, window_bounds = array<i64: 128, 128>}, {pipeline_mode = #tpu.pipeline_mode<synchronous>, transform_indices = @transform_4, window_bounds = array<i64: 1, 128>}, {pipeline_mode = #tpu.pipeline_mode<synchronous>, transform_indices = @transform_5, window_bounds = array<i64: 128, 128>}, {pipeline_mode = #tpu.pipeline_mode<synchronous>, transform_indices = @transform_6, window_bounds = array<i64: 1, 128>}, {transform_indices = @transform_7, window_bounds = array<i64: 32, 128>}]} {
    %c0 = arith.constant 0 : index
    %c0_0 = arith.constant 0 : index
    %0 = vector.load %arg1[%c0, %c0_0] : memref<32x16xf32, #tpu.memory_space<vmem>>, vector<32x16xf32>
    %1 = arith.truncf %0 : vector<32x16xf32> to vector<32x16xbf16>
    %c0_1 = arith.constant 0 : index
    %c0_2 = arith.constant 0 : index
    %2 = vector.load %arg2[%c0_1, %c0_2] : memref<16x128xbf16, #tpu.memory_space<vmem>>, vector<16x128xbf16>
    %cst = arith.constant dense<0.000000e+00> : vector<32x128xf32>
    %3 = tpu.matmul %1, %2, %cst {dimension_numbers = #tpu.dot_dimension_numbers<[1], [0], [0], [1], [0, 0, 1, 1], [], []>} : vector<32x16xbf16>, vector<16x128xbf16>, vector<32x128xf32> -> vector<32x128xf32>
    %c0_3 = arith.constant 0 : index
    %c0_4 = arith.constant 0 : index
    %4 = vector.load %arg3[%c0_3, %c0_4] : memref<1x128xf32, #tpu.memory_space<vmem>>, vector<1x128xf32>
    %5 = vector.broadcast %4 : vector<1x128xf32> to vector<32x128xf32>
    %6 = arith.addf %3, %5 : vector<32x128xf32>
    %cst_5 = arith.constant 0.000000e+00 : f32
    %7 = vector.broadcast %cst_5 : f32 to vector<32x128xf32>
    %8 = arith.maximumf %6, %7 : vector<32x128xf32>
    %9 = arith.truncf %8 : vector<32x128xf32> to vector<32x128xbf16>
    %c0_6 = arith.constant 0 : index
    %c0_7 = arith.constant 0 : index
    %10 = vector.load %arg4[%c0_6, %c0_7] : memref<128x128xbf16, #tpu.memory_space<vmem>>, vector<128x128xbf16>
    %cst_8 = arith.constant dense<0.000000e+00> : vector<32x128xf32>
    %11 = tpu.matmul %9, %10, %cst_8 {dimension_numbers = #tpu.dot_dimension_numbers<[1], [0], [0], [1], [0, 0, 1, 1], [], []>} : vector<32x128xbf16>, vector<128x128xbf16>, vector<32x128xf32> -> vector<32x128xf32>
    %c0_9 = arith.constant 0 : index
    %c0_10 = arith.constant 0 : index
    %12 = vector.load %arg5[%c0_9, %c0_10] : memref<1x128xf32, #tpu.memory_space<vmem>>, vector<1x128xf32>
    %13 = vector.broadcast %12 : vector<1x128xf32> to vector<32x128xf32>
    %14 = arith.addf %11, %13 : vector<32x128xf32>
    %cst_11 = arith.constant 0.000000e+00 : f32
    %15 = vector.broadcast %cst_11 : f32 to vector<32x128xf32>
    %16 = arith.maximumf %14, %15 : vector<32x128xf32>
    %17 = arith.truncf %16 : vector<32x128xf32> to vector<32x128xbf16>
    %c0_12 = arith.constant 0 : index
    %c0_13 = arith.constant 0 : index
    %18 = vector.load %arg6[%c0_12, %c0_13] : memref<128x128xbf16, #tpu.memory_space<vmem>>, vector<128x128xbf16>
    %cst_14 = arith.constant dense<0.000000e+00> : vector<32x128xf32>
    %19 = tpu.matmul %17, %18, %cst_14 {dimension_numbers = #tpu.dot_dimension_numbers<[1], [0], [0], [1], [0, 0, 1, 1], [], []>} : vector<32x128xbf16>, vector<128x128xbf16>, vector<32x128xf32> -> vector<32x128xf32>
    %c0_15 = arith.constant 0 : index
    %c0_16 = arith.constant 0 : index
    %20 = vector.load %arg7[%c0_15, %c0_16] : memref<1x128xf32, #tpu.memory_space<vmem>>, vector<1x128xf32>
    %21 = vector.broadcast %20 : vector<1x128xf32> to vector<32x128xf32>
    %22 = arith.addf %19, %21 : vector<32x128xf32>
    %23 = tpu.iota {dimensions = array<i32: 1>} : vector<32x128xi32>
    %c0_i32 = arith.constant 0 : i32
    %24 = vector.broadcast %c0_i32 : i32 to vector<32x128xi32>
    %25 = arith.cmpi sge, %23, %24 : vector<32x128xi32>
    %c3_i32 = arith.constant 3 : i32
    %26 = vector.broadcast %c3_i32 : i32 to vector<32x128xi32>
    %27 = arith.cmpi slt, %23, %26 : vector<32x128xi32>
    %28 = arith.andi %25, %27 : vector<32x128xi1>
    %c3_i32_17 = arith.constant 3 : i32
    %29 = vector.broadcast %c3_i32_17 : i32 to vector<32x128xi32>
    %30 = arith.cmpi sge, %23, %29 : vector<32x128xi32>
    %c7_i32 = arith.constant 7 : i32
    %31 = vector.broadcast %c7_i32 : i32 to vector<32x128xi32>
    %32 = arith.cmpi slt, %23, %31 : vector<32x128xi32>
    %33 = arith.andi %30, %32 : vector<32x128xi1>
    %cst_18 = arith.constant 0.000000e+00 : f32
    %34 = vector.broadcast %cst_18 : f32 to vector<32x128xf32>
    %cst_19 = arith.constant 0xFF800000 : f32
    %35 = vector.broadcast %cst_19 : f32 to vector<32x128xf32>
    %36 = arith.select %28, %22, %35 : vector<32x128xi1>, vector<32x128xf32>
    %cst_20 = arith.constant dense<0xFF800000> : vector<32xf32>
    %37 = vector.multi_reduction <maximumf>, %36, %cst_20 [1] : vector<32x128xf32> to vector<32xf32>
    %38 = vector.shape_cast %37 : vector<32xf32> to vector<32x1xf32>
    %39 = vector.shape_cast %38 : vector<32x1xf32> to vector<32x1xf32>
    %40 = vector.broadcast %39 : vector<32x1xf32> to vector<32x128xf32>
    %41 = arith.select %28, %40, %34 : vector<32x128xi1>, vector<32x128xf32>
    %cst_21 = arith.constant 0xFF800000 : f32
    %42 = vector.broadcast %cst_21 : f32 to vector<32x128xf32>
    %43 = arith.select %33, %22, %42 : vector<32x128xi1>, vector<32x128xf32>
    %cst_22 = arith.constant dense<0xFF800000> : vector<32xf32>
    %44 = vector.multi_reduction <maximumf>, %43, %cst_22 [1] : vector<32x128xf32> to vector<32xf32>
    %45 = vector.shape_cast %44 : vector<32xf32> to vector<32x1xf32>
    %46 = vector.shape_cast %45 : vector<32x1xf32> to vector<32x1xf32>
    %47 = vector.broadcast %46 : vector<32x1xf32> to vector<32x128xf32>
    %48 = arith.select %33, %47, %41 : vector<32x128xi1>, vector<32x128xf32>
    %49 = arith.subf %22, %48 : vector<32x128xf32>
    %50 = math.exp %49 : vector<32x128xf32>
    %cst_23 = arith.constant 1.000000e+00 : f32
    %51 = vector.broadcast %cst_23 : f32 to vector<32x128xf32>
    %cst_24 = arith.constant 0.000000e+00 : f32
    %52 = vector.broadcast %cst_24 : f32 to vector<32x128xf32>
    %53 = arith.select %28, %50, %52 : vector<32x128xi1>, vector<32x128xf32>
    %cst_25 = arith.constant dense<0.000000e+00> : vector<32xf32>
    %54 = vector.multi_reduction <add>, %53, %cst_25 [1] : vector<32x128xf32> to vector<32xf32>
    %55 = vector.shape_cast %54 : vector<32xf32> to vector<32x1xf32>
    %56 = vector.shape_cast %55 : vector<32x1xf32> to vector<32x1xf32>
    %57 = vector.broadcast %56 : vector<32x1xf32> to vector<32x128xf32>
    %58 = arith.select %28, %57, %51 : vector<32x128xi1>, vector<32x128xf32>
    %cst_26 = arith.constant 0.000000e+00 : f32
    %59 = vector.broadcast %cst_26 : f32 to vector<32x128xf32>
    %60 = arith.select %33, %50, %59 : vector<32x128xi1>, vector<32x128xf32>
    %cst_27 = arith.constant dense<0.000000e+00> : vector<32xf32>
    %61 = vector.multi_reduction <add>, %60, %cst_27 [1] : vector<32x128xf32> to vector<32xf32>
    %62 = vector.shape_cast %61 : vector<32xf32> to vector<32x1xf32>
    %63 = vector.shape_cast %62 : vector<32x1xf32> to vector<32x1xf32>
    %64 = vector.broadcast %63 : vector<32x1xf32> to vector<32x128xf32>
    %65 = arith.select %33, %64, %58 : vector<32x128xi1>, vector<32x128xf32>
    %66 = tpu.reciprocal %65 {approx = true} : vector<32x128xf32> -> vector<32x128xf32>
    %67 = arith.mulf %50, %66 : vector<32x128xf32>
    %68 = arith.truncf %67 : vector<32x128xf32> to vector<32x128xbf16>
    %c0_28 = arith.constant 0 : index
    %c0_29 = arith.constant 0 : index
    %69 = vector.load %arg8[%c0_28, %c0_29] : memref<32x128xbf16, #tpu.memory_space<vmem>>, vector<32x128xbf16>
    tpu.vector_store %arg8[%c0_28, %c0_29], %68 {strides = array<i32>} : memref<32x128xbf16, #tpu.memory_space<vmem>>, vector<32x128xbf16>,
    return
  }
  func.func @transform_0(%arg0: i32) -> (i32, i32) {
    %c0_i32 = arith.constant 0 : i32
    %c0_i32_0 = arith.constant 0 : i32
    return %arg0, %c0_i32 : i32, i32
  }
  func.func @transform_1(%arg0: i32) -> (i32, i32) {
    %c0_i32 = arith.constant 0 : i32
    %c0_i32_0 = arith.constant 0 : i32
    %c0_i32_1 = arith.constant 0 : i32
    return %c0_i32, %c0_i32_0 : i32, i32
  }
  func.func @transform_2(%arg0: i32) -> (i32, i32) {
    %c0_i32 = arith.constant 0 : i32
    %c0_i32_0 = arith.constant 0 : i32
    %c0_i32_1 = arith.constant 0 : i32
    return %c0_i32, %c0_i32_0 : i32, i32
  }
  func.func @transform_3(%arg0: i32) -> (i32, i32) {
    %c0_i32 = arith.constant 0 : i32
    %c0_i32_0 = arith.constant 0 : i32
    %c0_i32_1 = arith.constant 0 : i32
    return %c0_i32, %c0_i32_0 : i32, i32
  }
  func.func @transform_4(%arg0: i32) -> (i32, i32) {
    %c0_i32 = arith.constant 0 : i32
    %c0_i32_0 = arith.constant 0 : i32
    %c0_i32_1 = arith.constant 0 : i32
    return %c0_i32, %c0_i32_0 : i32, i32
  }
  func.func @transform_5(%arg0: i32) -> (i32, i32) {
    %c0_i32 = arith.constant 0 : i32
    %c0_i32_0 = arith.constant 0 : i32
    %c0_i32_1 = arith.constant 0 : i32
    return %c0_i32, %c0_i32_0 : i32, i32
  }
  func.func @transform_6(%arg0: i32) -> (i32, i32) {
    %c0_i32 = arith.constant 0 : i32
    %c0_i32_0 = arith.constant 0 : i32
    %c0_i32_1 = arith.constant 0 : i32
    return %c0_i32, %c0_i32_0 : i32, i32
  }
  func.func @transform_7(%arg0: i32) -> (i32, i32) {
    %c0_i32 = arith.constant 0 : i32
    %c0_i32_0 = arith.constant 0 : i32
    return %arg0, %c0_i32 : i32, i32
  }
}

</mosaic_0001>

<llo_original>
// kernel: tpu_custom_call.1
$region0: #{tpu_custom_call.1}
  #allocation0 [shape = 'u32[]', space=smem, size = 0x4, offset = 0x4, fixed_abs, tag = 'smem constant byte address 0x4 - core index']
  #allocation1 [shape = 'u32[144,128]{1,0:T(1,128)}', space=vmem, size = 0x12000, scoped, tag = 'internal scratch']
  %s0 = inlined_call_operand.vmem [shape: f32[64,16], index: 0, kind: input, shape index: {}]
  %s1 = inlined_call_operand.vmem [shape: bf16[16,128], index: 1, kind: input, shape index: {}]
  %s2 = inlined_call_operand.vmem [shape: f32[1,128], index: 2, kind: input, shape index: {}]
  %s3 = inlined_call_operand.vmem [shape: bf16[128,128], index: 3, kind: input, shape index: {}]
  %s4 = inlined_call_operand.vmem [shape: f32[1,128], index: 4, kind: input, shape index: {}]
  %s5 = inlined_call_operand.hbm [shape: bf16[128,128], index: 5, kind: input, shape index: {}]
  %s6 = inlined_call_operand.vmem [shape: f32[1,128], index: 6, kind: input, shape index: {}]
  %s7 = inlined_call_operand.hbm [shape: bf16[64,128], index: 7, kind: output, shape index: {}]
  %s8 = sld [smem:[#allocation0]]
  $region65: #{tpu_custom_call.1} parent=0
    _
  %s10 = ssub.s32 1, %s8
  %s11 = scalar_select 0, %s10, %s8
  $region1: #{tpu_custom_call.1} parent=0
    #allocation2 [shape = 'u8[32768]{0}', space=vmem, size = 0x8000, scoped, tag = 'input window, operand 5, single buffered']
    #allocation3 [shape = 's32[2]{0}', space=sflag, size = 0x8, scoped, tag = 'scoped memory for tpu_custom_call.1']
    #allocation4 [shape = 's32[2]{0}', space=sflag, size = 0x8, scoped, tag = 'scoped memory for tpu_custom_call.1']
    #allocation5 [shape = 'u8[16384]{0}', space=vmem, size = 0x4000, scoped, tag = 'output window, operand 0']
    %12 = vsyncpa [#allocation3], 0
    %13 = vsyncpa [#allocation4], 0
    %s14 = scalar_lea.sflag [#allocation4], 1
    %15 = vsyncpa %s14, 0
    loop: start=0, step=1, limit=4
    $region2: #{tpu_custom_call.1} parent=1 // loop_pre_header
      _
    $region3: #{tpu_custom_call.1} parent=1 // loop_header
      %s17 = sphi 0, %s21
      %p18 = scmp.ge.s32.totalorder %s17, 4
      %s27 = sphi 0, %s29
      %s30 = sphi 0, %s27
      %s31 = sphi 0, %s30
      %s47 = sphi 0, %s31
      %s51 = sphi 0, %s51
      %s53 = sphi 0, %s51
      %s54 = sphi 0, %s53
      %s68 = sphi 0, %s54
      %s72 = sphi 0, %s72
      %s74 = sphi 0, %s72
      %s75 = sphi 0, %s74
      %s89 = sphi 0, %s75
      %s93 = sphi 0, %s93
      %s95 = sphi 0, %s93
      %s96 = sphi 0, %s95
      %s110 = sphi 0, %s96
      %s114 = sphi 0, %s114
      %s116 = sphi 0, %s114
      %s117 = sphi 0, %s116
      %s131 = sphi 0, %s117
      %s135 = sphi 0, %s135
      %s137 = sphi 0, %s135
      %s138 = sphi 0, %s137
      %s152 = sphi 0, %s138
      %s156 = sphi 0, %s156
      %s158 = sphi 0, %s156
      %s159 = sphi 0, %s158
      %s173 = sphi 0, %s159
      %s179 = sphi 0, %s181
      %s182 = sphi 0, %s179
      %s183 = sphi 0, %s182
      %s199 = sphi 0, %s183
    $region4: #{tpu_custom_call.1} parent=1 // loop_header_branch
      %20 = sbr.rel (%p18) target = $region8
    $region5: #{tpu_custom_call.1} parent=1 // loop_body
      %s22 = ssub.s32 %s17, 1
      %s23 = ssub.s32 %s17, 2
      %s24 = sadd.s32 %s17, 1
      %s25 = ssub.s32 %s17, %s24
      %p26 = scmp.eq.s32.totalorder %s25, 0
      %s28 = sadd.s32 %s27, 1
      %s29 = scalar_select %p26, %s27, %s28
      %p32 = pneg %p26
      %p33 = scmp.eq.s32.totalorder %s17, 1
      %p34 = por %p32, %p33
      %p35 = scmp.ne.s32.totalorder %s27, %s30
      %p36 = scmp.eq.s32.totalorder %s17, 0
      %p37 = por %p35, %p36
      %p38 = scmp.ne.s32.totalorder %s27, %s30
      %p39 = scmp.eq.s32.totalorder %s22, 1
      %p40 = por %p38, %p39
      %p41 = scmp.ne.s32.totalorder %s30, %s31
      %p42 = scmp.eq.s32.totalorder %s22, 0
      %p43 = por %p41, %p42
      %p44 = scmp.ne.s32.totalorder %s30, %s31
      %p45 = scmp.eq.s32.totalorder %s23, 1
      %p46 = por %p44, %p45
      %p48 = scmp.ne.s32.totalorder %s31, %s47
      %p49 = scmp.eq.s32.totalorder %s23, 0
      %p50 = por %p48, %p49
      %s52 = sadd.s32 %s51, 1
      %p55 = scmp.eq.s32.totalorder %s17, 1
      %p56 = scmp.ne.s32.totalorder %s51, %s53
      %p57 = scmp.eq.s32.totalorder %s17, 0
      %p58 = por %p56, %p57
      %p59 = scmp.ne.s32.totalorder %s51, %s53
      %p60 = scmp.eq.s32.totalorder %s22, 1
      %p61 = por %p59, %p60
      %p62 = scmp.ne.s32.totalorder %s53, %s54
      %p63 = scmp.eq.s32.totalorder %s22, 0
      %p64 = por %p62, %p63
      %p65 = scmp.ne.s32.totalorder %s53, %s54
      %p66 = scmp.eq.s32.totalorder %s23, 1
      %p67 = por %p65, %p66
      %p69 = scmp.ne.s32.totalorder %s54, %s68
      %p70 = scmp.eq.s32.totalorder %s23, 0
      %p71 = por %p69, %p70
      %s73 = sadd.s32 %s72, 1
      %p76 = scmp.eq.s32.totalorder %s17, 1
      %p77 = scmp.ne.s32.totalorder %s72, %s74
      %p78 = scmp.eq.s32.totalorder %s17, 0
      %p79 = por %p77, %p78
      %p80 = scmp.ne.s32.totalorder %s72, %s74
      %p81 = scmp.eq.s32.totalorder %s22, 1
      %p82 = por %p80, %p81
      %p83 = scmp.ne.s32.totalorder %s74, %s75
      %p84 = scmp.eq.s32.totalorder %s22, 0
      %p85 = por %p83, %p84
      %p86 = scmp.ne.s32.totalorder %s74, %s75
      %p87 = scmp.eq.s32.totalorder %s23, 1
      %p88 = por %p86, %p87
      %p90 = scmp.ne.s32.totalorder %s75, %s89
      %p91 = scmp.eq.s32.totalorder %s23, 0
      %p92 = por %p90, %p91
      %s94 = sadd.s32 %s93, 1
      %p97 = scmp.eq.s32.totalorder %s17, 1
      %p98 = scmp.ne.s32.totalorder %s93, %s95
      %p99 = scmp.eq.s32.totalorder %s17, 0
      %p100 = por %p98, %p99
      %p101 = scmp.ne.s32.totalorder %s93, %s95
      %p102 = scmp.eq.s32.totalorder %s22, 1
      %p103 = por %p101, %p102
      %p104 = scmp.ne.s32.totalorder %s95, %s96
      %p105 = scmp.eq.s32.totalorder %s22, 0
      %p106 = por %p104, %p105
      %p107 = scmp.ne.s32.totalorder %s95, %s96
      %p108 = scmp.eq.s32.totalorder %s23, 1
      %p109 = por %p107, %p108
      %p111 = scmp.ne.s32.totalorder %s96, %s110
      %p112 = scmp.eq.s32.totalorder %s23, 0
      %p113 = por %p111, %p112
      %s115 = sadd.s32 %s114, 1
      %p118 = scmp.eq.s32.totalorder %s17, 1
      %p119 = scmp.ne.s32.totalorder %s114, %s116
      %p120 = scmp.eq.s32.totalorder %s17, 0
      %p121 = por %p119, %p120
      %p122 = scmp.ne.s32.totalorder %s114, %s116
      %p123 = scmp.eq.s32.totalorder %s22, 1
      %p124 = por %p122, %p123
      %p125 = scmp.ne.s32.totalorder %s116, %s117
      %p126 = scmp.eq.s32.totalorder %s22, 0
      %p127 = por %p125, %p126
      %p128 = scmp.ne.s32.totalorder %s116, %s117
      %p129 = scmp.eq.s32.totalorder %s23, 1
      %p130 = por %p128, %p129
      %p132 = scmp.ne.s32.totalorder %s117, %s131
      %p133 = scmp.eq.s32.totalorder %s23, 0
      %p134 = por %p132, %p133
      %s136 = sadd.s32 %s135, 1
      %p139 = scmp.eq.s32.totalorder %s17, 1
      %p140 = scmp.ne.s32.totalorder %s135, %s137
      %p141 = scmp.eq.s32.totalorder %s17, 0
      %p142 = por %p140, %p141
      %p143 = scmp.ne.s32.totalorder %s135, %s137
      %p144 = scmp.eq.s32.totalorder %s22, 1
      %p145 = por %p143, %p144
      %p146 = scmp.ne.s32.totalorder %s137, %s138
      %p147 = scmp.eq.s32.totalorder %s22, 0
      %p148 = por %p146, %p147
      %p149 = scmp.ne.s32.totalorder %s137, %s138
      %p150 = scmp.eq.s32.totalorder %s23, 1
      %p151 = por %p149, %p150
      %p153 = scmp.ne.s32.totalorder %s138, %s152
      %p154 = scmp.eq.s32.totalorder %s23, 0
      %p155 = por %p153, %p154
      %s157 = sadd.s32 %s156, 1
      %p160 = scmp.eq.s32.totalorder %s17, 1
      %p161 = scmp.ne.s32.totalorder %s156, %s158
      %p162 = scmp.eq.s32.totalorder %s17, 0
      %p163 = por %p161, %p162
      %p164 = scmp.ne.s32.totalorder %s156, %s158
      %p165 = scmp.eq.s32.totalorder %s22, 1
      %p166 = por %p164, %p165
      %p167 = scmp.ne.s32.totalorder %s158, %s159
      %p168 = scmp.eq.s32.totalorder %s22, 0
      %p169 = por %p167, %p168
      %p170 = scmp.ne.s32.totalorder %s158, %s159
      %p171 = scmp.eq.s32.totalorder %s23, 1
      %p172 = por %p170, %p171
      %p174 = scmp.ne.s32.totalorder %s159, %s173
      %p175 = scmp.eq.s32.totalorder %s23, 0
      %p176 = por %p174, %p175
      %s177 = ssub.s32 %s17, %s24
      %p178 = scmp.eq.s32.totalorder %s177, 0
      %s180 = sadd.s32 %s179, 1
      %s181 = scalar_select %p178, %s179, %s180
      %p184 = pneg %p178
      %p185 = scmp.eq.s32.totalorder %s17, 1
      %p186 = por %p184, %p185
      %p187 = scmp.ne.s32.totalorder %s179, %s182
      %p188 = scmp.eq.s32.totalorder %s17, 0
      %p189 = por %p187, %p188
      %p190 = scmp.ne.s32.totalorder %s179, %s182
      %p191 = scmp.eq.s32.totalorder %s22, 1
      %p192 = por %p190, %p191
      %p193 = scmp.ne.s32.totalorder %s182, %s183
      %p194 = scmp.eq.s32.totalorder %s22, 0
      %p195 = por %p193, %p194
      %p196 = scmp.ne.s32.totalorder %s182, %s183
      %p197 = scmp.eq.s32.totalorder %s23, 1
      %p198 = por %p196, %p197
      %p200 = scmp.ne.s32.totalorder %s183, %s199
      %p201 = scmp.eq.s32.totalorder %s23, 0
      %p202 = por %p200, %p201
      %p203 = scmp.le.s32.totalorder 1, %s17
      %p204 = scmp.lt.s32.totalorder %s17, 3
      %p205 = pnand %p203, %p204
      %p206 = pneg %p205
      // Predicated region
      $region9: #{tpu_custom_call.1} parent=5 // pred_check
        _
      $region10: #{tpu_custom_call.1} parent=5 // pred_check_branch
        %208 = sbr.rel (%p205) target = $region12
      $region11: #{tpu_custom_call.1} parent=5 // pred_region
        %s209 = ssub.s32 %s17, 1
        // Predicated region
        $region13: #{tpu_custom_call.1} parent=11 // pred_check
          %p210 = pneg %p64
        $region14: #{tpu_custom_call.1} parent=11 // pred_check_branch
          %212 = sbr.rel (%p210) target = $region16
        $region15: #{tpu_custom_call.1} parent=11 // pred_region
          _
        $region16: #{tpu_custom_call.1} parent=11 // pred_fallthru
          _
        // Predicated region
        $region17: #{tpu_custom_call.1} parent=11 // pred_check
          %p213 = pneg %p85
        $region18: #{tpu_custom_call.1} parent=11 // pred_check_branch
          %215 = sbr.rel (%p213) target = $region20
        $region19: #{tpu_custom_call.1} parent=11 // pred_region
          _
        $region20: #{tpu_custom_call.1} parent=11 // pred_fallthru
          _
        // Predicated region
        $region21: #{tpu_custom_call.1} parent=11 // pred_check
          %p216 = pneg %p106
        $region22: #{tpu_custom_call.1} parent=11 // pred_check_branch
          %218 = sbr.rel (%p216) target = $region24
        $region23: #{tpu_custom_call.1} parent=11 // pred_region
          _
        $region24: #{tpu_custom_call.1} parent=11 // pred_fallthru
          _
        // Predicated region
        $region25: #{tpu_custom_call.1} parent=11 // pred_check
          %p219 = pneg %p127
        $region26: #{tpu_custom_call.1} parent=11 // pred_check_branch
          %221 = sbr.rel (%p219) target = $region28
        $region27: #{tpu_custom_call.1} parent=11 // pred_region
          _
        $region28: #{tpu_custom_call.1} parent=11 // pred_fallthru
          _
        // Predicated region
        $region29: #{tpu_custom_call.1} parent=11 // pred_check
          %p222 = pneg %p148
        $region30: #{tpu_custom_call.1} parent=11 // pred_check_branch
          %224 = sbr.rel (%p222) target = $region32
        $region31: #{tpu_custom_call.1} parent=11 // pred_region
          %s226 = ssub.s32 1024, 1024
          %227 = vsyncadd [#allocation3], %s226
          %s228 = sshll.u32 [#allocation2], 4
          %s229 = int_to_ptr.vmem [resolvable:$true] %s228
          %234 = dma.hbm_to_vmem [thread:$0]  %s5, 1024, %s229, [#allocation3], 64, 64, 4
        $region32: #{tpu_custom_call.1} parent=11 // pred_fallthru
          _
        // Predicated region
        $region33: #{tpu_custom_call.1} parent=11 // pred_check
          %p235 = pneg %p169
        $region34: #{tpu_custom_call.1} parent=11 // pred_check_branch
          %237 = sbr.rel (%p235) target = $region36
        $region35: #{tpu_custom_call.1} parent=11 // pred_region
          _
        $region36: #{tpu_custom_call.1} parent=11 // pred_fallthru
          _
      $region12: #{tpu_custom_call.1} parent=5 // pred_fallthru
        _
      %p238 = scmp.lt.s32.totalorder %s17, 2
      // Predicated region
      $region37: #{tpu_custom_call.1} parent=5 // pred_check
        %p239 = pneg %p238
      $region38: #{tpu_custom_call.1} parent=5 // pred_check_branch
        %241 = sbr.rel (%p239) target = $region40
      $region39: #{tpu_custom_call.1} parent=5 // pred_region
        // Predicated region
        $region41: #{tpu_custom_call.1} parent=39 // pred_check
          %p242 = pneg %p37
        $region42: #{tpu_custom_call.1} parent=39 // pred_check_branch
          %244 = sbr.rel (%p242) target = $region44
        $region43: #{tpu_custom_call.1} parent=39 // pred_region
          %s245 = smul.u32 4, %s17
          %p246 = scmp.lt.s32.totalorder %s245, 7
          %s247 = scalar_select %p246, %s245, 7
          %s248 = smul.addr %s247, 8
          %s249 = scalar_lea.vmem %s0, %s248
          %s250 = smul.u32 4, %s17
        $region44: #{tpu_custom_call.1} parent=39 // pred_fallthru
          _
      $region40: #{tpu_custom_call.1} parent=5 // pred_fallthru
        _
      %p251 = scmp.le.s32.totalorder 1, %s17
      %p252 = scmp.lt.s32.totalorder %s17, 3
      %p253 = pnand %p251, %p252
      %p254 = pneg %p253
      // Predicated region
      $region45: #{tpu_custom_call.1} parent=5 // pred_check
        _
      $region46: #{tpu_custom_call.1} parent=5 // pred_check_branch
        %256 = sbr.rel (%p253) target = $region48
      $region47: #{tpu_custom_call.1} parent=5 // pred_region
        %s257 = ssub.s32 %s17, 1
        // Predicated region
        $region49: #{tpu_custom_call.1} parent=47 // pred_check
          %p258 = pneg %p148
        $region50: #{tpu_custom_call.1} parent=47 // pred_check_branch
          %260 = sbr.rel (%p258) target = $region52
        $region51: #{tpu_custom_call.1} parent=47 // pred_region
          %261 = dma.done [#allocation3], 1024
        $region52: #{tpu_custom_call.1} parent=47 // pred_fallthru
          _
        %s262 = smul.u32 4, %s22
        %p263 = scmp.lt.s32.totalorder %s262, 7
        %s264 = scalar_select %p263, %s262, 7
        %s265 = smul.addr %s264, 8
        %s266 = scalar_lea.vmem %s0, %s265
        %p267 = pneg %p43
        %p268 = pneg %p40
        %p269 = pneg %p64
        %p270 = pneg %p61
        %p271 = pneg %p85
        %p272 = pneg %p82
        %p273 = pneg %p106
        %p274 = pneg %p103
        %p275 = pneg %p127
        %p276 = pneg %p124
        %p277 = pneg %p148
        %p278 = pneg %p145
        %p279 = pneg %p169
        %p280 = pneg %p166
        %p281 = pneg %p195
        %p282 = pneg %p192
        %s283 = sand.u32 %s182, 1
        %s284 = scalar_lea.sflag [#allocation4], %s283
        %s285 = sand.u32 %s182, 1
        %s286 = smul.addr %s285, 16
        %s287 = scalar_lea.vmem [#allocation5], %s286
        %s288 = smul.u32 4, %s22
        %p289 = scmp.lt.s32.totalorder %s288, 7
        %s290 = scalar_select %p289, %s288, 7
        %s291 = smul.addr %s290, 8
        %s292 = scalar_lea.vmem %s0, %s291
        %s293 = smul.u32 4, %s22
        %s294 = smul.u32 4, %s22
        %v296 = vld [vmem:[%s292] sm:$0xff]
        %v297 = vld [vmem:[%s292 + $0x8] sm:$0xff]
        %v298 = vld [vmem:[%s292 + $0x10] sm:$0xff]
        %v299 = vld [vmem:[%s292 + $0x18] sm:$0xff]
        %v300 = vpack.c.bf16 %v297, %v296
        %v301 = vpack.c.bf16 %v299, %v298
        %v302 = vld [vmem:[%s1] sm:$0xf]
        %v303 = vld [vmem:[%s1 + $0x4] sm:$0xf]
        %v304 = vld [vmem:[%s2] sm:$0x1]
        %v306 = vlaneseq
        %v307 = vshrl.u32 %v306, 7
        %v308 = vsub.s32 0, %v307
        %v309 = vrot.slane %v304, %v308
        %v313 = vunpack.c.l.b16 %v302
        %v314 = vunpack.c.l.b16 %v303
        %v315 = vpack.c.b16 %v314, %v313
        %vm317 = vcmask 130048
        %v319 = vsel %vm317, %v300, 0
        %v322 = vsel %vm317, %v301, 0
        %324 = vmatprep.subr.bf16.mxu0 0
        %325 = vmatpush1.bf16.msra.mxu0 0
        %326 = vmatprep.subr.bf16.mxu0 0
        %327 = vmatpush1.bf16.msra.mxu0 0
        %328 = vmatprep.subr.bf16.mxu0 0
        %329 = vmatpush1.bf16.msra.mxu0 0
        %330 = vmatprep.subr.bf16.mxu0 0
        %331 = vmatpush1.bf16.msra.mxu0 0
        %332 = vmatprep.subr.bf16.mxu0 0
        %333 = vmatpush1.bf16.msra.mxu0 0
        %334 = vmatprep.subr.bf16.mxu0 0
        %335 = vmatpush1.bf16.msra.mxu0 0
        %336 = vmatprep.subr.bf16.mxu0 0
        %337 = vmatpush1.bf16.msra.mxu0 0
        %338 = vmatprep.subr.bf16.mxu0 0
        %339 = vmatpush1.bf16.msra.mxu0 %v315
        %340 = vmatprep.subr.bf16.mxu0 0
        %341 = vmatpush2.bf16.msra.mxu0 0
        %342 = vmatprep.subr.bf16.mxu0 0
        %343 = vmatpush2.bf16.msra.mxu0 0
        %344 = vmatprep.subr.bf16.mxu0 0
        %345 = vmatpush2.bf16.msra.mxu0 0
        %346 = vmatprep.subr.bf16.mxu0 0
        %347 = vmatpush2.bf16.msra.mxu0 0
        %348 = vmatprep.subr.bf16.mxu0 0
        %349 = vmatpush2.bf16.msra.mxu0 0
        %350 = vmatprep.subr.bf16.mxu0 0
        %351 = vmatpush2.bf16.msra.mxu0 0
        %352 = vmatprep.subr.bf16.mxu0 0
        %353 = vmatpush2.bf16.msra.mxu0 0
        %354 = vmatprep.subr.bf16.mxu0 0
        %355 = vmatpush2.bf16.msra.mxu0 0
        %356 = vmatprep.mubr.bf16.mxu0 0
        %357 = vmatmul.mubr.bf16.gmra.mxu0 %v319
        %v358 = vpop.f32.mrf.mxu0
        %v359 = vadd.f32 %v309, %v358
        %v360 = vpop.f32.mrf.mxu0
        %v361 = vpop.f32.mrf.mxu0
        %v362 = vadd.f32 %v309, %v361
        %v363 = vpop.f32.mrf.mxu0
        %364 = vmatprep.mubr.bf16.mxu0 0
        %365 = vmatmul.mubr.bf16.gmra.mxu0 %v322
        %v366 = vpop.f32.mrf.mxu0
        %v367 = vadd.f32 %v309, %v366
        %v368 = vpop.f32.mrf.mxu0
        %v369 = vpop.f32.mrf.mxu0
        %v370 = vadd.f32 %v309, %v369
        %v371 = vpop.f32.mrf.mxu0
        %372 = vdwg.mxu0
        %v373 = vmax.f32 %v359, 0.0
        %v374 = vmax.f32 %v362, 0.0
        %v375 = vmax.f32 %v367, 0.0
        %v376 = vmax.f32 %v370, 0.0
        %v377 = vpack.c.bf16 %v374, %v373
        %v378 = vpack.c.bf16 %v376, %v375
        %v379 = vld [vmem:[%s3] sm:$0xf]
        %v380 = vld [vmem:[%s3 + $0x4] sm:$0xf]
        %v381 = vld [vmem:[%s3 + $0x8] sm:$0xf]
        %v382 = vld [vmem:[%s3 + $0xc] sm:$0xf]
        %v383 = vld [vmem:[%s3 + $0x10] sm:$0xf]
        %v384 = vld [vmem:[%s3 + $0x14] sm:$0xf]
        %v385 = vld [vmem:[%s3 + $0x18] sm:$0xf]
        %v386 = vld [vmem:[%s3 + $0x1c] sm:$0xf]
        %v387 = vld [vmem:[%s3 + $0x20] sm:$0xf]
        %v388 = vld [vmem:[%s3 + $0x24] sm:$0xf]
        %v389 = vld [vmem:[%s3 + $0x28] sm:$0xf]
        %v390 = vld [vmem:[%s3 + $0x2c] sm:$0xf]
        %v391 = vld [vmem:[%s3 + $0x30] sm:$0xf]
        %v392 = vld [vmem:[%s3 + $0x34] sm:$0xf]
        %v393 = vld [vmem:[%s3 + $0x38] sm:$0xf]
        %v394 = vld [vmem:[%s3 + $0x3c] sm:$0xf]
        %v395 = vld [vmem:[%s4] sm:$0x1]
        %v397 = vlaneseq
        %v398 = vshrl.u32 %v397, 7
        %v399 = vsub.s32 0, %v398
        %v400 = vrot.slane %v395, %v399
        %v418 = vunpack.c.l.b16 %v379
        %v419 = vunpack.c.l.b16 %v380
        %v420 = vunpack.c.l.b16 %v381
        %v421 = vunpack.c.l.b16 %v382
        %v422 = vunpack.c.l.b16 %v383
        %v423 = vunpack.c.l.b16 %v384
        %v424 = vunpack.c.l.b16 %v385
        %v425 = vunpack.c.l.b16 %v386
        %v426 = vunpack.c.l.b16 %v387
        %v427 = vunpack.c.l.b16 %v388
        %v428 = vunpack.c.l.b16 %v389
        %v429 = vunpack.c.l.b16 %v390
        %v430 = vunpack.c.l.b16 %v391
        %v431 = vunpack.c.l.b16 %v392
        %v432 = vunpack.c.l.b16 %v393
        %v433 = vunpack.c.l.b16 %v394
        %v434 = vpack.c.b16 %v419, %v418
        %v435 = vpack.c.b16 %v421, %v420
        %v436 = vpack.c.b16 %v423, %v422
        %v437 = vpack.c.b16 %v425, %v424
        %v438 = vpack.c.b16 %v427, %v426
        %v439 = vpack.c.b16 %v429, %v428
        %v440 = vpack.c.b16 %v431, %v430
        %v441 = vpack.c.b16 %v433, %v432
        %450 = vmatprep.subr.bf16.mxu0 0
        %451 = vmatpush1.bf16.msra.mxu0 %v441
        %452 = vmatprep.subr.bf16.mxu0 0
        %453 = vmatpush1.bf16.msra.mxu0 %v440
        %454 = vmatprep.subr.bf16.mxu0 0
        %455 = vmatpush1.bf16.msra.mxu0 %v439
        %456 = vmatprep.subr.bf16.mxu0 0
        %457 = vmatpush1.bf16.msra.mxu0 %v438
        %458 = vmatprep.subr.bf16.mxu0 0
        %459 = vmatpush1.bf16.msra.mxu0 %v437
        %460 = vmatprep.subr.bf16.mxu0 0
        %461 = vmatpush1.bf16.msra.mxu0 %v436
        %462 = vmatprep.subr.bf16.mxu0 0
        %463 = vmatpush1.bf16.msra.mxu0 %v435
        %464 = vmatprep.subr.bf16.mxu0 0
        %465 = vmatpush1.bf16.msra.mxu0 %v434
        %466 = vmatprep.subr.bf16.mxu0 0
        %467 = vmatpush2.bf16.msra.mxu0 0
        %468 = vmatprep.subr.bf16.mxu0 0
        %469 = vmatpush2.bf16.msra.mxu0 0
        %470 = vmatprep.subr.bf16.mxu0 0
        %471 = vmatpush2.bf16.msra.mxu0 0
        %472 = vmatprep.subr.bf16.mxu0 0
        %473 = vmatpush2.bf16.msra.mxu0 0
        %474 = vmatprep.subr.bf16.mxu0 0
        %475 = vmatpush2.bf16.msra.mxu0 0
        %476 = vmatprep.subr.bf16.mxu0 0
        %477 = vmatpush2.bf16.msra.mxu0 0
        %478 = vmatprep.subr.bf16.mxu0 0
        %479 = vmatpush2.bf16.msra.mxu0 0
        %480 = vmatprep.subr.bf16.mxu0 0
        %481 = vmatpush2.bf16.msra.mxu0 0
        %482 = vmatprep.mubr.bf16.mxu0 0
        %483 = vmatmul.mubr.bf16.gmra.mxu0 %v377
        %v484 = vpop.f32.mrf.mxu0
        %v485 = vadd.f32 %v400, %v484
        %v486 = vpop.f32.mrf.mxu0
        %v487 = vpop.f32.mrf.mxu0
        %v488 = vadd.f32 %v400, %v487
        %v489 = vpop.f32.mrf.mxu0
        %490 = vmatprep.mubr.bf16.mxu0 0
        %491 = vmatmul.mubr.bf16.gmra.mxu0 %v378
        %v492 = vpop.f32.mrf.mxu0
        %v493 = vadd.f32 %v400, %v492
        %v494 = vpop.f32.mrf.mxu0
        %v495 = vpop.f32.mrf.mxu0
        %v496 = vadd.f32 %v400, %v495
        %v497 = vpop.f32.mrf.mxu0
        %498 = vdwg.mxu0
        %v499 = vmax.f32 %v485, 0.0
        %v500 = vmax.f32 %v488, 0.0
        %v501 = vmax.f32 %v493, 0.0
        %v502 = vmax.f32 %v496, 0.0
        %v503 = vpack.c.bf16 %v500, %v499
        %v504 = vpack.c.bf16 %v502, %v501
        %v505 = vld [vmem:[#allocation2] sm:$0xf]
        %v506 = vld [vmem:[#allocation2 + $0x4] sm:$0xf]
        %v507 = vld [vmem:[#allocation2 + $0x8] sm:$0xf]
        %v508 = vld [vmem:[#allocation2 + $0xc] sm:$0xf]
        %v509 = vld [vmem:[#allocation2 + $0x10] sm:$0xf]
        %v510 = vld [vmem:[#allocation2 + $0x14] sm:$0xf]
        %v511 = vld [vmem:[#allocation2 + $0x18] sm:$0xf]
        %v512 = vld [vmem:[#allocation2 + $0x1c] sm:$0xf]
        %v513 = vld [vmem:[#allocation2 + $0x20] sm:$0xf]
        %v514 = vld [vmem:[#allocation2 + $0x24] sm:$0xf]
        %v515 = vld [vmem:[#allocation2 + $0x28] sm:$0xf]
        %v516 = vld [vmem:[#allocation2 + $0x2c] sm:$0xf]
        %v517 = vld [vmem:[#allocation2 + $0x30] sm:$0xf]
        %v518 = vld [vmem:[#allocation2 + $0x34] sm:$0xf]
        %v519 = vld [vmem:[#allocation2 + $0x38] sm:$0xf]
        %v520 = vld [vmem:[#allocation2 + $0x3c] sm:$0xf]
        %v521 = vld [vmem:[%s6] sm:$0x1]
        %v523 = vlaneseq
        %v524 = vshrl.u32 %v523, 7
        %v525 = vsub.s32 0, %v524
        %v526 = vrot.slane %v521, %v525
        %v544 = vunpack.c.l.b16 %v505
        %v545 = vunpack.c.l.b16 %v506
        %v546 = vunpack.c.l.b16 %v507
        %v547 = vunpack.c.l.b16 %v508
        %v548 = vunpack.c.l.b16 %v509
        %v549 = vunpack.c.l.b16 %v510
        %v550 = vunpack.c.l.b16 %v511
        %v551 = vunpack.c.l.b16 %v512
        %v552 = vunpack.c.l.b16 %v513
        %v553 = vunpack.c.l.b16 %v514
        %v554 = vunpack.c.l.b16 %v515
        %v555 = vunpack.c.l.b16 %v516
        %v556 = vunpack.c.l.b16 %v517
        %v557 = vunpack.c.l.b16 %v518
        %v558 = vunpack.c.l.b16 %v519
        %v559 = vunpack.c.l.b16 %v520
        %v560 = vpack.c.b16 %v545, %v544
        %v561 = vpack.c.b16 %v547, %v546
        %v562 = vpack.c.b16 %v549, %v548
        %v563 = vpack.c.b16 %v551, %v550
        %v564 = vpack.c.b16 %v553, %v552
        %v565 = vpack.c.b16 %v555, %v554
        %v566 = vpack.c.b16 %v557, %v556
        %v567 = vpack.c.b16 %v559, %v558
        %576 = vmatprep.subr.bf16.mxu0 0
        %577 = vmatpush1.bf16.msra.mxu0 %v567
        %578 = vmatprep.subr.bf16.mxu0 0
        %579 = vmatpush1.bf16.msra.mxu0 %v566
        %580 = vmatprep.subr.bf16.mxu0 0
        %581 = vmatpush1.bf16.msra.mxu0 %v565
        %582 = vmatprep.subr.bf16.mxu0 0
        %583 = vmatpush1.bf16.msra.mxu0 %v564
        %584 = vmatprep.subr.bf16.mxu0 0
        %585 = vmatpush1.bf16.msra.mxu0 %v563
        %586 = vmatprep.subr.bf16.mxu0 0
        %587 = vmatpush1.bf16.msra.mxu0 %v562
        %588 = vmatprep.subr.bf16.mxu0 0
        %589 = vmatpush1.bf16.msra.mxu0 %v561
        %590 = vmatprep.subr.bf16.mxu0 0
        %591 = vmatpush1.bf16.msra.mxu0 %v560
        %592 = vmatprep.subr.bf16.mxu0 0
        %593 = vmatpush2.bf16.msra.mxu0 0
        %594 = vmatprep.subr.bf16.mxu0 0
        %595 = vmatpush2.bf16.msra.mxu0 0
        %596 = vmatprep.subr.bf16.mxu0 0
        %597 = vmatpush2.bf16.msra.mxu0 0
        %598 = vmatprep.subr.bf16.mxu0 0
        %599 = vmatpush2.bf16.msra.mxu0 0
        %600 = vmatprep.subr.bf16.mxu0 0
        %601 = vmatpush2.bf16.msra.mxu0 0
        %602 = vmatprep.subr.bf16.mxu0 0
        %603 = vmatpush2.bf16.msra.mxu0 0
        %604 = vmatprep.subr.bf16.mxu0 0
        %605 = vmatpush2.bf16.msra.mxu0 0
        %606 = vmatprep.subr.bf16.mxu0 0
        %607 = vmatpush2.bf16.msra.mxu0 0
        %608 = vmatprep.mubr.bf16.mxu0 0
        %609 = vmatmul.mubr.bf16.gmra.mxu0 %v503
        %v610 = vpop.f32.mrf.mxu0
        %v611 = vadd.f32 %v526, %v610
        %v612 = vpop.f32.mrf.mxu0
        %v613 = vpop.f32.mrf.mxu0
        %v614 = vadd.f32 %v526, %v613
        %v615 = vpop.f32.mrf.mxu0
        %616 = vmatprep.mubr.bf16.mxu0 0
        %617 = vmatmul.mubr.bf16.gmra.mxu0 %v504
        %v618 = vpop.f32.mrf.mxu0
        %v619 = vadd.f32 %v526, %v618
        %v620 = vpop.f32.mrf.mxu0
        %v621 = vpop.f32.mrf.mxu0
        %v622 = vadd.f32 %v526, %v621
        %v623 = vpop.f32.mrf.mxu0
        %624 = vdwg.mxu0
        %v625 = vlaneseq
        %v626 = vand.u32 %v625, 127
        %vm627 = vcmp.ge.s32.totalorder %v626, 0
        %vm628 = vcmp.lt.s32.totalorder %v626, 3
        %vm629 = vmand %vm627, %vm628
        %vm630 = vcmp.ge.s32.totalorder %v626, 3
        %vm631 = vcmp.lt.s32.totalorder %v626, 7
        %vm632 = vmand %vm630, %vm631
        %v633 = vsel %vm629, %v611, -inf
        %v634 = vsel %vm629, %v614, -inf
        %v635 = vsel %vm629, %v619, -inf
        %v636 = vsel %vm629, %v622, -inf
        %637 = vmax.xlane.f32.xlu0 %v633
        %v638 = vpop.xlane.xlu0 %637
        %639 = vmax.xlane.f32.xlu0 %v634
        %v640 = vpop.xlane.xlu0 %639
        %641 = vmax.xlane.f32.xlu0 %v635
        %v642 = vpop.xlane.xlu0 %641
        %643 = vmax.xlane.f32.xlu0 %v636
        %v644 = vpop.xlane.xlu0 %643
        %v645 = vsel %vm629, %v638, 0.0
        %v646 = vsel %vm629, %v640, 0.0
        %v647 = vsel %vm629, %v642, 0.0
        %v648 = vsel %vm629, %v644, 0.0
        %v649 = vsel %vm632, %v611, -inf
        %v650 = vsel %vm632, %v614, -inf
        %v651 = vsel %vm632, %v619, -inf
        %v652 = vsel %vm632, %v622, -inf
        %653 = vmax.xlane.f32.xlu0 %v649
        %v654 = vpop.xlane.xlu0 %653
        %655 = vmax.xlane.f32.xlu0 %v650
        %v656 = vpop.xlane.xlu0 %655
        %657 = vmax.xlane.f32.xlu0 %v651
        %v658 = vpop.xlane.xlu0 %657
        %659 = vmax.xlane.f32.xlu0 %v652
        %v660 = vpop.xlane.xlu0 %659
        %v661 = vsel %vm632, %v654, %v645
        %v662 = vsel %vm632, %v656, %v646
        %v663 = vsel %vm632, %v658, %v647
        %v664 = vsel %vm632, %v660, %v648
        %v665 = vsub.f32 %v611, %v661
        %v666 = vsub.f32 %v614, %v662
        %v667 = vsub.f32 %v619, %v663
        %v668 = vsub.f32 %v622, %v664
        %v669 = vmul.f32 %v665, 1.442695
        %v670 = vpow.pop %v669
        %v671 = vmul.f32 %v666, 1.442695
        %v672 = vpow.pop %v671
        %v673 = vmul.f32 %v667, 1.442695
        %v674 = vpow.pop %v673
        %v675 = vmul.f32 %v668, 1.442695
        %v676 = vpow.pop %v675
        %v677 = vsel %vm629, %v670, 0.0
        %v678 = vsel %vm629, %v672, 0.0
        %v679 = vsel %vm629, %v674, 0.0
        %v680 = vsel %vm629, %v676, 0.0
        %681 = vadd.xlane.f32.xlu0 %v677
        %v682 = vpop.xlane.xlu0 %681
        %683 = vadd.xlane.f32.xlu0 %v678
        %v684 = vpop.xlane.xlu0 %683
        %685 = vadd.xlane.f32.xlu0 %v679
        %v686 = vpop.xlane.xlu0 %685
        %687 = vadd.xlane.f32.xlu0 %v680
        %v688 = vpop.xlane.xlu0 %687
        %v689 = vsel %vm629, %v682, 1.0
        %v690 = vsel %vm629, %v684, 1.0
        %v691 = vsel %vm629, %v686, 1.0
        %v692 = vsel %vm629, %v688, 1.0
        %v693 = vsel %vm632, %v670, 0.0
        %v694 = vsel %vm632, %v672, 0.0
        %v695 = vsel %vm632, %v674, 0.0
        %v696 = vsel %vm632, %v676, 0.0
        %697 = vadd.xlane.f32.xlu0 %v693
        %v698 = vpop.xlane.xlu0 %697
        %699 = vadd.xlane.f32.xlu0 %v694
        %v700 = vpop.xlane.xlu0 %699
        %701 = vadd.xlane.f32.xlu0 %v695
        %v702 = vpop.xlane.xlu0 %701
        %703 = vadd.xlane.f32.xlu0 %v696
        %v704 = vpop.xlane.xlu0 %703
        %v705 = vsel %vm632, %v698, %v689
        %v706 = vsel %vm632, %v700, %v690
        %v707 = vsel %vm632, %v702, %v691
        %v708 = vsel %vm632, %v704, %v692
        %v709 = vrcp.pop %v705
        %v710 = vrcp.pop %v706
        %v711 = vrcp.pop %v707
        %v712 = vrcp.pop %v708
        %v713 = vmul.f32 %v670, %v709
        %v714 = vmul.f32 %v672, %v710
        %v715 = vmul.f32 %v674, %v711
        %v716 = vmul.f32 %v676, %v712
        %v717 = vpack.c.bf16 %v714, %v713
        %v718 = vpack.c.bf16 %v716, %v715
        %v721 = vunpack.c.l.b16 %v717
        %v722 = vunpack.c.h.b16 %v717
        %v723 = vunpack.c.l.b16 %v718
        %v724 = vunpack.c.h.b16 %v718
        %v725 = vpack.c.b16 %v721, %v721
        %v726 = vpack.c.b16 %v722, %v722
        %v727 = vpack.c.b16 %v723, %v723
        %v728 = vpack.c.b16 %v724, %v724
        %733 = vst [vmem:[%s287] sm:$0xf] %v725
        %734 = vst [vmem:[%s287 + $0x4] sm:$0xf] %v726
        %735 = vst [vmem:[%s287 + $0x8] sm:$0xf] %v727
        %736 = vst [vmem:[%s287 + $0xc] sm:$0xf] %v728
        %s737 = sand.u32 %s182, 1
        %s738 = scalar_lea.sflag [#allocation4], %s737
        %s739 = sand.u32 %s182, 1
        %s740 = smul.addr %s739, 16
        %s741 = scalar_lea.vmem [#allocation5], %s740
        // Predicated region
        $region53: #{tpu_custom_call.1} parent=47 // pred_check
          %p742 = pneg %p192
        $region54: #{tpu_custom_call.1} parent=47 // pred_check_branch
          %744 = sbr.rel (%p742) target = $region56
        $region55: #{tpu_custom_call.1} parent=47 // pred_region
          %s745 = smul.u32 4, %s22
          %s747 = ssub.s32 256, 256
          %748 = vsyncadd %s738, %s747
          %s749 = smul.addr %s745, 64
          %s750 = scalar_lea.hbm %s7, %s749
          %s751 = sshll.u32 %s741, 4
          %s752 = int_to_ptr.vmem [resolvable:$true] %s751
          %757 = dma.vmem_to_hbm [thread:$0]  %s752, 256, %s750, %s738, 64, 64, 4
        $region56: #{tpu_custom_call.1} parent=47 // pred_fallthru
          _
      $region48: #{tpu_custom_call.1} parent=5 // pred_fallthru
        _
      %p758 = scmp.le.s32.totalorder 2, %s17
      // Predicated region
      $region57: #{tpu_custom_call.1} parent=5 // pred_check
        %p759 = pneg %p758
      $region58: #{tpu_custom_call.1} parent=5 // pred_check_branch
        %761 = sbr.rel (%p759) target = $region60
      $region59: #{tpu_custom_call.1} parent=5 // pred_region
        %s762 = ssub.s32 %s17, 2
        // Predicated region
        $region61: #{tpu_custom_call.1} parent=59 // pred_check
          %p763 = pneg %p198
        $region62: #{tpu_custom_call.1} parent=59 // pred_check_branch
          %765 = sbr.rel (%p763) target = $region64
        $region63: #{tpu_custom_call.1} parent=59 // pred_region
          %s766 = sand.u32 %s183, 1
          %s767 = scalar_lea.sflag [#allocation4], %s766
          %s768 = sand.u32 %s183, 1
          %s769 = smul.addr %s768, 16
          %s770 = scalar_lea.vmem [#allocation5], %s769
          %771 = dma.done %s767, 256
        $region64: #{tpu_custom_call.1} parent=59 // pred_fallthru
          _
      $region60: #{tpu_custom_call.1} parent=5 // pred_fallthru
        _
    $region6: #{tpu_custom_call.1} parent=1 // loop_footer
      %s21 = sadd.s32 1, %s17
    $region7: #{tpu_custom_call.1} parent=1 // loop_footer_branch
      %16 = sbr.rel target = $region3
    $region8: #{tpu_custom_call.1} parent=1 // loop_exit
      _
    %772 = vsyncpa [#allocation3], 1
    %s773 = scalar_lea.sflag [#allocation3], 1
    %774 = vsyncpa %s773, 1
    %775 = vsyncpa [#allocation4], 1
    %s776 = scalar_lea.sflag [#allocation4], 1
    %777 = vsyncpa %s776, 1

</llo_original>
